<compile_context>
chip_gen: v7x
topology: tpu7x:2x2x1
jax: 0.10.0
libtpu: 0.0.40
codegen_flags: <defaults>
</compile_context>

<pallas_src>
import numpy as np
import jax
import jax.numpy as jnp
from jax.experimental import pallas as pl
from jax.experimental.pallas import tpu as pltpu


def project_kernel(h_ref, wfc_ref, acat_ref, z_ref, a2_ref):
    # z = fc(h)   (nn.Linear, no bias), padded out-dim Dp
    z = jnp.dot(h_ref[...], wfc_ref[...], preferred_element_type=jnp.float32)
    z_ref[...] = z
    # fused attention projections: column 0 = z . a_src, column 1 = z . a_dst
    a2_ref[...] = jnp.dot(z, acat_ref[...], preferred_element_type=jnp.float32)


def aggregate_kernel(adjT_ref, z_all_ref, z_dst_ref, asrc_row_ref,
                     adst_col_ref, wedge_ref, out_ref):
    adjT = adjT_ref[...]            # [TN, N]   adjT[d, s] = 1.0 if edge s->d
    z = z_all_ref[...]              # [N, Dp]   all source features
    z_dst = z_dst_ref[...]          # [TN, Dp]  destination features (this tile)

    # edge attention logits, dst-major: alpha[d, s] = z_s.a_src + z_d.a_dst
    # Pure broadcast add — no K=1 outer-product matmul, no extra NxN temporaries.
    alpha = asrc_row_ref[...] + adst_col_ref[...]           # [TN, N]

    # masked softmax over incoming edges (last axis == sources == lanes)
    mask = adjT > 0.0
    logits = jnp.where(mask, alpha, -1e30)
    m = jnp.max(logits, axis=-1, keepdims=True)             # [TN, 1]
    p = jnp.where(mask, jnp.exp(logits - m), 0.0)           # [TN, N]
    denom = jnp.sum(p, axis=-1, keepdims=True)              # [TN, 1]
    denom = jnp.where(denom > 0.0, denom, 1.0)              # 0-in-degree guard
    inv = pl.reciprocal(denom, approx=False)                # [TN, 1]

    # h1[d] = sum_s softmax(alpha)[d, s] * z_s  — normalization deferred to the
    # [TN, Dp] result instead of forming attn = p/denom as a full [TN, N] array.
    h1 = jnp.dot(p, z, preferred_element_type=jnp.float32) * inv         # [TN, Dp]

    # h2[d] = sum_{s in N(d)} edge_fc([z_s, z_d])
    #       = [sum_s z_s, deg(d) * z_d] @ W_edge^T     (single fused matmul)
    zsum = jnp.dot(adjT, z, preferred_element_type=jnp.float32)          # [TN, Dp]
    deg = jnp.sum(adjT, axis=-1, keepdims=True)                          # [TN, 1]
    cat = jnp.concatenate([zsum, deg * z_dst], axis=-1)                  # [TN, 2Dp]
    h2 = jnp.dot(cat, wedge_ref[...], preferred_element_type=jnp.float32)

    out_ref[...] = h1 + h2


def graph_layer_edge(h, adj, w_fc, w_attn, w_edge, *, tile_n=256):
    """h: [N, Din]; adj: [N, N] float mask with adj[src, dst]; weights in the
    PyTorch nn.Linear convention: w_fc [Do, Din], w_attn [1, 2*Do],
    w_edge [Do, 2*Do]."""
    h = jnp.asarray(h, jnp.float32)
    w_fc = jnp.asarray(w_fc, jnp.float32)
    w_attn = jnp.asarray(w_attn, jnp.float32)
    w_edge = jnp.asarray(w_edge, jnp.float32)

    n, din = h.shape
    do = w_fc.shape[0]
    dp = ((do + 127) // 128) * 128      # lane-dense padded feature dim

    # --- weight prep (zero-padded to Dp so every matmul output is lane-dense)
    wfc_p = jnp.zeros((din, dp), jnp.float32).at[:, :do].set(w_fc.T)
    acat_p = jnp.zeros((dp, 2), jnp.float32)
    acat_p = acat_p.at[:do, 0].set(w_attn[0, :do])                 # a_src
    acat_p = acat_p.at[:do, 1].set(w_attn[0, do:])                 # a_dst
    wedge_p = jnp.zeros((2 * dp, dp), jnp.float32)
    wedge_p = wedge_p.at[:do, :do].set(w_edge[:, :do].T)           # multiplies zsum
    wedge_p = wedge_p.at[dp:dp + do, :do].set(w_edge[:, do:].T)    # multiplies deg*z_d

    # dst-major adjacency (free layout plumbing in the wrapper)
    adj_t = jnp.asarray(adj, jnp.float32).T                        # [dst, src]
    # NOTE: on v6e/v7x adj_t and the p/z MXU operands could be cast to bf16
    # (f32 accumulation) for ~2x MXU rate; kept f32 here for exact parity with
    # the f32 PyTorch module.

    # destination-tile size: a multiple-of-8 tile that divides N, else whole array.
    if n % tile_n == 0 and tile_n % 8 == 0:
        tn = tile_n
    else:
        tn = n
    grid = (n // tn,)

    cparams = pltpu.CompilerParams(
        dimension_semantics=("parallel",),          # shards dst tiles across TCs on v7x
        vmem_limit_bytes=48 * 1024 * 1024,          # explicit; fits v7x's 64 MiB VMEM
    )

    # --- pass 1: z = fc(h) and fused attention projections ------------------
    z, a2 = pl.pallas_call(
        project_kernel,
        out_shape=(jax.ShapeDtypeStruct((n, dp), jnp.float32),
                   jax.ShapeDtypeStruct((n, 2), jnp.float32)),
        grid=grid,
        in_specs=[pl.BlockSpec((tn, din), lambda i: (i, 0)),
                  pl.BlockSpec((din, dp), lambda i: (0, 0)),
                  pl.BlockSpec((dp, 2), lambda i: (0, 0))],
        out_specs=(pl.BlockSpec((tn, dp), lambda i: (i, 0)),
                   pl.BlockSpec((tn, 2), lambda i: (i, 0))),
        compiler_params=cparams,
    )(h, wfc_p, acat_p)

    # layout plumbing: per-source row / per-destination column of the logits
    a_src_row = a2[:, 0].reshape(1, n)    # [1, N]
    a_dst_col = a2[:, 1].reshape(n, 1)    # [N, 1]

    # --- pass 2: attention softmax + aggregation, gridded over dst tiles ----
    out_p = pl.pallas_call(
        aggregate_kernel,
        out_shape=jax.ShapeDtypeStruct((n, dp), jnp.float32),
        grid=grid,
        in_specs=[pl.BlockSpec((tn, n), lambda i: (i, 0)),      # adj_T (dst tile)
                  pl.BlockSpec((n, dp), lambda i: (0, 0)),      # z, all sources
                  pl.BlockSpec((tn, dp), lambda i: (i, 0)),     # z, dst tile
                  pl.BlockSpec((1, n), lambda i: (0, 0)),       # a_src row
                  pl.BlockSpec((tn, 1), lambda i: (i, 0)),      # a_dst column
                  pl.BlockSpec((2 * dp, dp), lambda i: (0, 0))],
        out_specs=pl.BlockSpec((tn, dp), lambda i: (i, 0)),
        compiler_params=cparams,
    )(adj_t, z, z, a_src_row, a_dst_col, wedge_p)

    return out_p[:, :do]


def reference(h, src, dst, w_fc, w_attn, w_edge):
    """Pure-JAX edge-list reference mimicking the DGL semantics."""
    n = h.shape[0]
    z = h @ w_fc.T
    z2 = jnp.concatenate([z[src], z[dst]], axis=1)
    a = z2 @ w_attn.T          # [E, 1]
    e = z2 @ w_edge.T          # [E, Do]
    out = []
    for d in range(n):
        idx = np.nonzero(dst == d)[0]
        ai = a[idx]                                   # [deg, 1]
        alpha = jax.nn.softmax(ai, axis=0)
        h1 = jnp.sum(alpha * z[src[idx]], axis=0)
        h2 = jnp.sum(e[idx], axis=0)
        out.append(h1 + h2)
    return jnp.stack(out)


if __name__ == "__main__":
    N, DIN, DOUT = 8, 16, 32

    key = jax.random.PRNGKey(0)
    k1, k2, k3, k4 = jax.random.split(key, 4)
    h = jax.random.normal(k1, (N, DIN), jnp.float32)
    w_fc = 0.1 * jax.random.normal(k2, (DOUT, DIN), jnp.float32)         # fc.weight
    w_attn = 0.1 * jax.random.normal(k3, (1, 2 * DOUT), jnp.float32)     # attn_fc.weight
    w_edge = 0.1 * jax.random.normal(k4, (DOUT, 2 * DOUT), jnp.float32)  # edge_fc.weight

    # Deterministic graph: ring edges (i -> i+1) plus skip-3 edges (i -> i+3);
    # every node has at least one incoming edge.
    src = np.concatenate([np.arange(N), np.arange(N)]).astype(np.int32)
    dst = np.concatenate([(np.arange(N) + 1) % N, (np.arange(N) + 3) % N]).astype(np.int32)
    adj_np = np.zeros((N, N), np.float32)
    adj_np[src, dst] = 1.0
    adj = jnp.asarray(adj_np)

    out = graph_layer_edge(h, adj, w_fc, w_attn, w_edge)
    out = jax.block_until_ready(out)

    ref = reference(h, src, dst, w_fc, w_attn, w_edge)
    np.testing.assert_allclose(np.asarray(out), np.asarray(ref), rtol=1e-4, atol=1e-4)

    print("KERNEL_OK")
</pallas_src>

<mosaic_0001>
module attributes {stable_mosaic.version = 11 : i64} {
  func.func @project_kernel(%arg0: i32, %arg1: memref<8x16xf32, #tpu.memory_space<vmem>>, %arg2: memref<16x128xf32, #tpu.memory_space<vmem>>, %arg3: memref<128x2xf32, #tpu.memory_space<vmem>>, %arg4: memref<8x128xf32, #tpu.memory_space<vmem>>, %arg5: memref<8x2xf32, #tpu.memory_space<vmem>>) attributes {dimension_semantics = [#tpu.dimension_semantics<parallel>], iteration_bounds = array<i64: 1>, scalar_prefetch = 0 : i64, scratch_operands = 0 : i64, tpu.core_type = #tpu.core_type<tc>, window_params = [{transform_indices = @transform_0, window_bounds = array<i64: 8, 16>}, {pipeline_mode = #tpu.pipeline_mode<synchronous>, transform_indices = @transform_1, window_bounds = array<i64: 16, 128>}, {pipeline_mode = #tpu.pipeline_mode<synchronous>, transform_indices = @transform_2, window_bounds = array<i64: 128, 2>}, {transform_indices = @transform_3, window_bounds = array<i64: 8, 128>}, {transform_indices = @transform_4, window_bounds = array<i64: 8, 2>}]} {
    %c0 = arith.constant 0 : index
    %c0_0 = arith.constant 0 : index
    %0 = vector.load %arg1[%c0, %c0_0] : memref<8x16xf32, #tpu.memory_space<vmem>>, vector<8x16xf32>
    %c0_1 = arith.constant 0 : index
    %c0_2 = arith.constant 0 : index
    %1 = vector.load %arg2[%c0_1, %c0_2] : memref<16x128xf32, #tpu.memory_space<vmem>>, vector<16x128xf32>
    %cst = arith.constant dense<0.000000e+00> : vector<8x128xf32>
    %2 = tpu.matmul %0, %1, %cst {dimension_numbers = #tpu.dot_dimension_numbers<[1], [0], [0], [1], [0, 0, 1, 1], [], []>} : vector<8x16xf32>, vector<16x128xf32>, vector<8x128xf32> -> vector<8x128xf32>
    %c0_3 = arith.constant 0 : index
    %c0_4 = arith.constant 0 : index
    %3 = vector.load %arg4[%c0_3, %c0_4] : memref<8x128xf32, #tpu.memory_space<vmem>>, vector<8x128xf32>
    tpu.vector_store %arg4[%c0_3, %c0_4], %2 {strides = array<i32>} : memref<8x128xf32, #tpu.memory_space<vmem>>, vector<8x128xf32>,
    %c0_5 = arith.constant 0 : index
    %c0_6 = arith.constant 0 : index
    %4 = vector.load %arg3[%c0_5, %c0_6] : memref<128x2xf32, #tpu.memory_space<vmem>>, vector<128x2xf32>
    %cst_7 = arith.constant dense<0.000000e+00> : vector<8x2xf32>
    %5 = tpu.matmul %2, %4, %cst_7 {dimension_numbers = #tpu.dot_dimension_numbers<[1], [0], [0], [1], [0, 0, 1, 1], [], []>} : vector<8x128xf32>, vector<128x2xf32>, vector<8x2xf32> -> vector<8x2xf32>
    %c0_8 = arith.constant 0 : index
    %c0_9 = arith.constant 0 : index
    %6 = vector.load %arg5[%c0_8, %c0_9] : memref<8x2xf32, #tpu.memory_space<vmem>>, vector<8x2xf32>
    tpu.vector_store %arg5[%c0_8, %c0_9], %5 {strides = array<i32>} : memref<8x2xf32, #tpu.memory_space<vmem>>, vector<8x2xf32>,
    return
  }
  func.func @transform_0(%arg0: i32) -> (i32, i32) {
    %c0_i32 = arith.constant 0 : i32
    %c0_i32_0 = arith.constant 0 : i32
    return %arg0, %c0_i32 : i32, i32
  }
  func.func @transform_1(%arg0: i32) -> (i32, i32) {
    %c0_i32 = arith.constant 0 : i32
    %c0_i32_0 = arith.constant 0 : i32
    %c0_i32_1 = arith.constant 0 : i32
    return %c0_i32, %c0_i32_0 : i32, i32
  }
  func.func @transform_2(%arg0: i32) -> (i32, i32) {
    %c0_i32 = arith.constant 0 : i32
    %c0_i32_0 = arith.constant 0 : i32
    %c0_i32_1 = arith.constant 0 : i32
    return %c0_i32, %c0_i32_0 : i32, i32
  }
  func.func @transform_3(%arg0: i32) -> (i32, i32) {
    %c0_i32 = arith.constant 0 : i32
    %c0_i32_0 = arith.constant 0 : i32
    return %arg0, %c0_i32 : i32, i32
  }
  func.func @transform_4(%arg0: i32) -> (i32, i32) {
    %c0_i32 = arith.constant 0 : i32
    %c0_i32_0 = arith.constant 0 : i32
    return %arg0, %c0_i32 : i32, i32
  }
}

</mosaic_0001>

<llo_original>
// kernel: tpu_custom_call.1
$region0: #{tpu_custom_call.1}
  #allocation0 [shape = 'u32[]', space=smem, size = 0x4, offset = 0x4, fixed_abs, tag = 'smem constant byte address 0x4 - core index']
  #allocation1 [shape = 'u32[144,128]{1,0:T(1,128)}', space=vmem, size = 0x12000, scoped, tag = 'internal scratch']
  %s0 = inlined_call_operand.vmem [shape: f32[8,16], index: 0, kind: input, shape index: {}]
  %s1 = inlined_call_operand.vmem [shape: f32[16,128], index: 1, kind: input, shape index: {}]
  %s2 = inlined_call_operand.vmem [shape: f32[128,2], index: 2, kind: input, shape index: {}]
  %s3 = inlined_call_operand.hbm [shape: f32[8,128], index: 3, kind: output, shape index: {0}]
  %s4 = inlined_call_operand.vmem [shape: f32[8,2], index: 4, kind: output, shape index: {1}]
  %5 = xla_tuple %s3, %s4
  %s6 = sld [smem:[#allocation0]]
  $region30: #{tpu_custom_call.1} parent=0
    _
  %s8 = ssub.s32 1, %s6
  %s9 = scalar_select 0, %s8, %s6
  $region1: #{tpu_custom_call.1} parent=0
    #allocation2 [shape = 'u8[4096]{0}', space=vmem, size = 0x1000, scoped, tag = 'output window, operand 0, single buffered']
    #allocation3 [shape = 's32[1]{0}', space=sflag, size = 0x4, scoped, tag = 'scoped memory for tpu_custom_call.1']
    %10 = vsyncpa [#allocation3], 0
    // Predicated region
    $region2: #{tpu_custom_call.1} parent=1 // pred_check
      _
    $region3: #{tpu_custom_call.1} parent=1 // pred_check_branch
      %12 = sbr.rel (0) target = $region5
    $region4: #{tpu_custom_call.1} parent=1 // pred_region
      _
    $region5: #{tpu_custom_call.1} parent=1 // pred_fallthru
      _
    // Predicated region
    $region6: #{tpu_custom_call.1} parent=1 // pred_check
      _
    $region7: #{tpu_custom_call.1} parent=1 // pred_check_branch
      %14 = sbr.rel (0) target = $region9
    $region8: #{tpu_custom_call.1} parent=1 // pred_region
      _
    $region9: #{tpu_custom_call.1} parent=1 // pred_fallthru
      _
    // Predicated region
    $region10: #{tpu_custom_call.1} parent=1 // pred_check
      _
    $region11: #{tpu_custom_call.1} parent=1 // pred_check_branch
      %16 = sbr.rel (0) target = $region13
    $region12: #{tpu_custom_call.1} parent=1 // pred_region
      _
    $region13: #{tpu_custom_call.1} parent=1 // pred_fallthru
      _
    %v17 = vld [vmem:[%s0] sm:$0xff]
    %v18 = vld [vmem:[%s1] sm:$0xff]
    %v19 = vld [vmem:[%s1 + $0x8] sm:$0xff]
    %vm20 = vcmask 130048
    %v22 = vsel %vm20, %v17, 0
    %24 = vmatprep.subr.mxu0 0.0
    %25 = vmatpush1.msra.mxu0 %v18
    %26 = vmatprep.subr.mxu0 0.0
    %27 = vmatpush1.msra.mxu0 %v19
    %28 = vmatprep.subr.mxu0 0.0
    %29 = vmatpush1.msra.mxu0 0.0
    %30 = vmatprep.subr.mxu0 0.0
    %31 = vmatpush1.msra.mxu0 0.0
    %32 = vmatprep.subr.mxu0 0.0
    %33 = vmatpush1.msra.mxu0 0.0
    %34 = vmatprep.subr.mxu0 0.0
    %35 = vmatpush1.msra.mxu0 0.0
    %36 = vmatprep.subr.mxu0 0.0
    %37 = vmatpush1.msra.mxu0 0.0
    %38 = vmatprep.subr.mxu0 0.0
    %39 = vmatpush1.msra.mxu0 0.0
    %40 = vmatprep.subr.mxu0 0.0
    %41 = vmatpush1.msra.mxu0 0.0
    %42 = vmatprep.subr.mxu0 0.0
    %43 = vmatpush1.msra.mxu0 0.0
    %44 = vmatprep.subr.mxu0 0.0
    %45 = vmatpush1.msra.mxu0 0.0
    %46 = vmatprep.subr.mxu0 0.0
    %47 = vmatpush1.msra.mxu0 0.0
    %48 = vmatprep.subr.mxu0 0.0
    %49 = vmatpush1.msra.mxu0 0.0
    %50 = vmatprep.subr.mxu0 0.0
    %51 = vmatpush1.msra.mxu0 0.0
    %52 = vmatprep.subr.mxu0 0.0
    %53 = vmatpush1.msra.mxu0 0.0
    %54 = vmatprep.subr.mxu0 0.0
    %55 = vmatpush1.msra.mxu0 0.0
    %56 = vmatprep.subr.mxu0 0.0
    %57 = vmatpush1.msra.mxu0 0.0
    %58 = vmatprep.subr.mxu0 0.0
    %59 = vmatpush1.msra.mxu0 0.0
    %60 = vmatprep.subr.mxu0 0.0
    %61 = vmatpush1.msra.mxu0 0.0
    %62 = vmatprep.subr.mxu0 0.0
    %63 = vmatpush1.msra.mxu0 0.0
    %64 = vmatprep.subr.mxu0 0.0
    %65 = vmatpush1.msra.mxu0 0.0
    %66 = vmatprep.subr.mxu0 0.0
    %67 = vmatpush1.msra.mxu0 0.0
    %68 = vmatprep.subr.mxu0 0.0
    %69 = vmatpush1.msra.mxu0 0.0
    %70 = vmatprep.subr.mxu0 0.0
    %71 = vmatpush1.msra.mxu0 0.0
    %72 = vmatprep.subr.mxu0 0.0
    %73 = vmatpush1.msra.mxu0 0.0
    %74 = vmatprep.subr.mxu0 0.0
    %75 = vmatpush1.msra.mxu0 0.0
    %76 = vmatprep.subr.mxu0 0.0
    %77 = vmatpush1.msra.mxu0 0.0
    %78 = vmatprep.subr.mxu0 0.0
    %79 = vmatpush1.msra.mxu0 0.0
    %80 = vmatprep.subr.mxu0 0.0
    %81 = vmatpush1.msra.mxu0 0.0
    %82 = vmatprep.subr.mxu0 0.0
    %83 = vmatpush1.msra.mxu0 0.0
    %84 = vmatprep.subr.mxu0 0.0
    %85 = vmatpush1.msra.mxu0 0.0
    %86 = vmatprep.subr.mxu0 0.0
    %87 = vmatpush1.msra.mxu0 0.0
    %88 = vmatprep.mubr.f32.mxu0 0.0
    %89 = vmatmul.mubr.f32.gmra.mrb[0].mxu0 %v22
    %v90 = vpop.f32.mrb[0].mxu0
    %v91 = vadd.f32 0.0, %v90
    %v92 = vpop.f32.mrb[0].mxu0
    %93 = vdwg.mxu0
    %94 = vst [vmem:[#allocation2] sm:$0xff] %v91
    %v95 = vld [vmem:[%s2] sm:$0xff]
    %v96 = vld [vmem:[%s2 + $0x8] sm:$0xff]
    %v97 = vld [vmem:[%s2 + $0x10] sm:$0xff]
    %v98 = vld [vmem:[%s2 + $0x18] sm:$0xff]
    %v99 = vld [vmem:[%s2 + $0x20] sm:$0xff]
    %v100 = vld [vmem:[%s2 + $0x28] sm:$0xff]
    %v101 = vld [vmem:[%s2 + $0x30] sm:$0xff]
    %v102 = vld [vmem:[%s2 + $0x38] sm:$0xff]
    %v103 = vld [vmem:[%s2 + $0x40] sm:$0xff]
    %v104 = vld [vmem:[%s2 + $0x48] sm:$0xff]
    %v105 = vld [vmem:[%s2 + $0x50] sm:$0xff]
    %v106 = vld [vmem:[%s2 + $0x58] sm:$0xff]
    %v107 = vld [vmem:[%s2 + $0x60] sm:$0xff]
    %v108 = vld [vmem:[%s2 + $0x68] sm:$0xff]
    %v109 = vld [vmem:[%s2 + $0x70] sm:$0xff]
    %v110 = vld [vmem:[%s2 + $0x78] sm:$0xff]
    %111 = vmatprep.subr.mxu0 0.0
    %112 = vmatpush1.msra.mxu0 %v95
    %113 = vmatprep.subr.mxu0 0.0
    %114 = vmatpush1.msra.mxu0 %v96
    %115 = vmatprep.subr.mxu0 0.0
    %116 = vmatpush1.msra.mxu0 %v97
    %117 = vmatprep.subr.mxu0 0.0
    %118 = vmatpush1.msra.mxu0 %v98
    %119 = vmatprep.subr.mxu0 0.0
    %120 = vmatpush1.msra.mxu0 %v99
    %121 = vmatprep.subr.mxu0 0.0
    %122 = vmatpush1.msra.mxu0 %v100
    %123 = vmatprep.subr.mxu0 0.0
    %124 = vmatpush1.msra.mxu0 %v101
    %125 = vmatprep.subr.mxu0 0.0
    %126 = vmatpush1.msra.mxu0 %v102
    %127 = vmatprep.subr.mxu0 0.0
    %128 = vmatpush1.msra.mxu0 %v103
    %129 = vmatprep.subr.mxu0 0.0
    %130 = vmatpush1.msra.mxu0 %v104
    %131 = vmatprep.subr.mxu0 0.0
    %132 = vmatpush1.msra.mxu0 %v105
    %133 = vmatprep.subr.mxu0 0.0
    %134 = vmatpush1.msra.mxu0 %v106
    %135 = vmatprep.subr.mxu0 0.0
    %136 = vmatpush1.msra.mxu0 %v107
    %137 = vmatprep.subr.mxu0 0.0
    %138 = vmatpush1.msra.mxu0 %v108
    %139 = vmatprep.subr.mxu0 0.0
    %140 = vmatpush1.msra.mxu0 %v109
    %141 = vmatprep.subr.mxu0 0.0
    %142 = vmatpush1.msra.mxu0 %v110
    %143 = vmatprep.subr.mxu0 0.0
    %144 = vmatpush1.msra.mxu0 0.0
    %145 = vmatprep.subr.mxu0 0.0
    %146 = vmatpush1.msra.mxu0 0.0
    %147 = vmatprep.subr.mxu0 0.0
    %148 = vmatpush1.msra.mxu0 0.0
    %149 = vmatprep.subr.mxu0 0.0
    %150 = vmatpush1.msra.mxu0 0.0
    %151 = vmatprep.subr.mxu0 0.0
    %152 = vmatpush1.msra.mxu0 0.0
    %153 = vmatprep.subr.mxu0 0.0
    %154 = vmatpush1.msra.mxu0 0.0
    %155 = vmatprep.subr.mxu0 0.0
    %156 = vmatpush1.msra.mxu0 0.0
    %157 = vmatprep.subr.mxu0 0.0
    %158 = vmatpush1.msra.mxu0 0.0
    %159 = vmatprep.subr.mxu0 0.0
    %160 = vmatpush1.msra.mxu0 0.0
    %161 = vmatprep.subr.mxu0 0.0
    %162 = vmatpush1.msra.mxu0 0.0
    %163 = vmatprep.subr.mxu0 0.0
    %164 = vmatpush1.msra.mxu0 0.0
    %165 = vmatprep.subr.mxu0 0.0
    %166 = vmatpush1.msra.mxu0 0.0
    %167 = vmatprep.subr.mxu0 0.0
    %168 = vmatpush1.msra.mxu0 0.0
    %169 = vmatprep.subr.mxu0 0.0
    %170 = vmatpush1.msra.mxu0 0.0
    %171 = vmatprep.subr.mxu0 0.0
    %172 = vmatpush1.msra.mxu0 0.0
    %173 = vmatprep.subr.mxu0 0.0
    %174 = vmatpush1.msra.mxu0 0.0
    %175 = vmatprep.mubr.f32.mxu0 0.0
    %176 = vmatmul.mubr.f32.gmra.mrb[0].mxu0 %v91
    %v177 = vpop.f32.mrb[0].mxu0
    %v178 = vadd.f32 0.0, %v177
    %v179 = vpop.f32.mrb[0].mxu0
    %180 = vdwg.mxu0
    %vm181 = vcmask 15360
    %182 = vst.msk [vmem:[%s4] sm:$0xff] %vm181, %v178
    // Predicated region
    $region14: #{tpu_custom_call.1} parent=1 // pred_check
      _
    $region15: #{tpu_custom_call.1} parent=1 // pred_check_branch
      %184 = sbr.rel (0) target = $region17
    $region16: #{tpu_custom_call.1} parent=1 // pred_region
      %s186 = ssub.s32 128, 128
      %187 = vsyncadd [#allocation3], %s186
      %s189 = sshll.u32 [#allocation2], 4
      %s190 = int_to_ptr.vmem [resolvable:$true] %s189
      %192 = dma.vmem_to_hbm [thread:$0]  %s190, 128, %s3, [#allocation3]
    $region17: #{tpu_custom_call.1} parent=1 // pred_fallthru
      _
    // Predicated region
    $region18: #{tpu_custom_call.1} parent=1 // pred_check
      _
    $region19: #{tpu_custom_call.1} parent=1 // pred_check_branch
      %194 = sbr.rel (0) target = $region21
    $region20: #{tpu_custom_call.1} parent=1 // pred_region
      _
    $region21: #{tpu_custom_call.1} parent=1 // pred_fallthru
      _
    // Predicated region
    $region22: #{tpu_custom_call.1} parent=1 // pred_check
      _
    $region23: #{tpu_custom_call.1} parent=1 // pred_check_branch
      %196 = sbr.rel (0) target = $region25
    $region24: #{tpu_custom_call.1} parent=1 // pred_region
      %197 = dma.done [#allocation3], 128
    $region25: #{tpu_custom_call.1} parent=1 // pred_fallthru
      _
    // Predicated region
    $region26: #{tpu_custom_call.1} parent=1 // pred_check
      _
    $region27: #{tpu_custom_call.1} parent=1 // pred_check_branch
      %199 = sbr.rel (0) target = $region29
    $region28: #{tpu_custom_call.1} parent=1 // pred_region
      _
    $region29: #{tpu_custom_call.1} parent=1 // pred_fallthru
      _
    %200 = vsyncpa [#allocation3], 1

</llo_original>
